<compile_context>
chip_gen: v7x
topology: tpu7x:2x2x1
jax: 0.10.0
libtpu: 0.0.40
codegen_flags: <defaults>
</compile_context>

<pallas_src>
import jax
import jax.numpy as jnp
from jax.experimental import pallas as pl
from jax.experimental.pallas import tpu as pltpu


def _branch_gating_sum_kernel(x_ref, gate_ref, o_ref):
    # x_ref:    (TB, n_b, TH)  VMEM tile
    # gate_ref: (n_b, TH)      VMEM tile (re-used across the inner batch axis)
    # o_ref:    (TB, TH)       VMEM tile
    x = x_ref[...].astype(jnp.float32)
    gate = gate_ref[...].astype(jnp.float32)
    # soma_func == 'sum': reduce over the branch dimension (dim=1), f32 accumulate.
    o_ref[...] = jnp.sum(x * gate[None, :, :], axis=1).astype(o_ref.dtype)
    # TODO(synk): other soma_func variants (median, max, softmax_T multinomial
    # sampling, lse, relu/tanh/... sums) are not implemented here.


def _pick_tile(dim, align, cap):
    """Largest tile t <= cap with dim % t == 0 and t % align == 0.
    Falls back to the full dim (always a legal Pallas block) if none exists."""
    cap = max(align, min(dim, cap))
    start = (cap // align) * align
    for t in range(start, 0, -align):
        if dim % t == 0:
            return t
    return dim


def branch_gating_forward(x, gate, *, tile_h=None, tile_b=None):
    """x: (B, n_b, H) float, gate: (n_b, H) float -> (B, H) in x.dtype."""
    B, n_b, H = x.shape
    assert gate.shape == (n_b, H), f"gate shape {gate.shape} != {(n_b, H)}"

    itemsize = jnp.dtype(x.dtype).itemsize
    lane_align = 128
    sub_align = max(8, 32 // itemsize)  # 8 for f32, 16 for bf16, 32 for int8/fp8

    # Lane (H) tile: as wide as divisibility allows, up to 2048 lanes.
    if tile_h is None:
        tile_h = _pick_tile(H, lane_align, 2048)
    # Batch tile: keep the (TB, n_b, TH) x tile around ~4 MiB so the
    # double-buffered working set (x, gate, out, f32 intermediate) stays well
    # under the 48 MiB scoped limit on every generation (v7x has 64 MiB VMEM).
    if tile_b is None:
        x_tile_budget = 4 * 1024 * 1024
        tb_cap = max(sub_align, x_tile_budget // max(1, n_b * tile_h * itemsize))
        tile_b = _pick_tile(B, sub_align, tb_cap)

    assert H % tile_h == 0, "tile_h must divide H"
    assert B % tile_b == 0, "tile_b must divide B"

    # Grid: (H tiles, B tiles). Batch is the inner (fastest) axis so the gate
    # block index is constant across it and Pallas skips re-DMAing the gate.
    grid = (H // tile_h, B // tile_b)

    return pl.pallas_call(
        _branch_gating_sum_kernel,
        out_shape=jax.ShapeDtypeStruct((B, H), x.dtype),
        grid_spec=pltpu.PrefetchScalarGridSpec(
            num_scalar_prefetch=0,
            grid=grid,
            in_specs=[
                pl.BlockSpec((tile_b, n_b, tile_h), lambda h, b: (b, 0, h)),
                pl.BlockSpec((n_b, tile_h), lambda h, b: (0, h)),
            ],
            out_specs=pl.BlockSpec((tile_b, tile_h), lambda h, b: (b, h)),
        ),
        compiler_params=pltpu.CompilerParams(
            dimension_semantics=("parallel", "parallel"),
            vmem_limit_bytes=48 * 1024 * 1024,
        ),
    )(x, gate)


def make_branch_mask(key, n_b, n_next_h, sparsity):
    """Equivalent of gen_branching_mask (non-deterministic path):
    bernoulli with P(1) = 1 - sparsity, shape (n_b, n_next_h).
    The module caches this per context, so it is module state (an input to the
    kernel), not re-sampled per forward.
    TODO(synk): deterministic (det_masks=True) latent-rotation mask path and
    learn_gates tanh-gated parameter path are not implemented."""
    probs = jnp.full((n_b, n_next_h), 1.0 - sparsity, dtype=jnp.float32)
    return jax.random.bernoulli(key, probs).astype(jnp.float32)


def reference_forward(x, gate):
    return jnp.sum(
        x.astype(jnp.float32) * gate.astype(jnp.float32)[None, :, :], axis=1
    ).astype(x.dtype)


def _check(x, gate, tol, **kw):
    out = jax.block_until_ready(branch_gating_forward(x, gate, **kw))
    ref = reference_forward(x, gate)
    assert out.shape == ref.shape and out.dtype == ref.dtype
    assert jnp.allclose(
        out.astype(jnp.float32), ref.astype(jnp.float32), atol=tol, rtol=tol
    ), "mismatch vs reference"


if __name__ == "__main__":
    key = jax.random.PRNGKey(0)

    # 1) Module demo config: n_next_h=128, n_b=8, batch=8, sparsity=0.5, f32.
    k1, k2, k3, k4, k5, k6 = jax.random.split(key, 6)
    B, n_b, H = 8, 8, 128
    x = jax.random.normal(k1, (B, n_b, H), dtype=jnp.float32)
    gate = make_branch_mask(k2, n_b, H, sparsity=0.5)
    _check(x, gate, tol=1e-5)

    # 2) bf16 inputs (halved HBM traffic), f32 accumulation inside the kernel.
    B, n_b, H = 32, 4, 256
    x_bf = jax.random.normal(k3, (B, n_b, H), dtype=jnp.bfloat16)
    gate_bf = make_branch_mask(k4, n_b, H, sparsity=0.25)
    _check(x_bf, gate_bf, tol=1e-2)

    # 3) Multi-block grid (exercises batch tiling + gate reuse across b axis).
    B, n_b, H = 16, 8, 512
    x3 = jax.random.normal(k5, (B, n_b, H), dtype=jnp.float32)
    gate3 = make_branch_mask(k6, n_b, H, sparsity=0.5)
    _check(x3, gate3, tol=1e-5, tile_h=128, tile_b=8)

    print("KERNEL_OK")
</pallas_src>

<mosaic_0001>
module attributes {stable_mosaic.version = 11 : i64} {
  func.func @_branch_gating_sum_kernel(%arg0: i32, %arg1: i32, %arg2: memref<8x8x128xf32, #tpu.memory_space<vmem>>, %arg3: memref<8x128xf32, #tpu.memory_space<vmem>>, %arg4: memref<8x128xf32, #tpu.memory_space<vmem>>) attributes {dimension_semantics = [#tpu.dimension_semantics<parallel>, #tpu.dimension_semantics<parallel>], iteration_bounds = array<i64: 1, 1>, scalar_prefetch = 0 : i64, scratch_operands = 0 : i64, tpu.core_type = #tpu.core_type<tc>, window_params = [{transform_indices = @transform_0, window_bounds = array<i64: 8, 8, 128>}, {transform_indices = @transform_1, window_bounds = array<i64: 8, 128>}, {transform_indices = @transform_2, window_bounds = array<i64: 8, 128>}]} {
    %c0 = arith.constant 0 : index
    %c0_0 = arith.constant 0 : index
    %c0_1 = arith.constant 0 : index
    %0 = vector.load %arg2[%c0, %c0_0, %c0_1] : memref<8x8x128xf32, #tpu.memory_space<vmem>>, vector<8x8x128xf32>
    %c0_2 = arith.constant 0 : index
    %c0_3 = arith.constant 0 : index
    %1 = vector.load %arg3[%c0_2, %c0_3] : memref<8x128xf32, #tpu.memory_space<vmem>>, vector<8x128xf32>
    %2 = vector.shape_cast %1 : vector<8x128xf32> to vector<1x8x128xf32>
    %3 = vector.broadcast %2 : vector<1x8x128xf32> to vector<8x8x128xf32>
    %4 = arith.mulf %0, %3 : vector<8x8x128xf32>
    %cst = arith.constant dense<0.000000e+00> : vector<8x128xf32>
    %5 = vector.multi_reduction <add>, %4, %cst [1] : vector<8x8x128xf32> to vector<8x128xf32>
    %c0_4 = arith.constant 0 : index
    %c0_5 = arith.constant 0 : index
    %6 = vector.load %arg4[%c0_4, %c0_5] : memref<8x128xf32, #tpu.memory_space<vmem>>, vector<8x128xf32>
    tpu.vector_store %arg4[%c0_4, %c0_5], %5 {strides = array<i32>} : memref<8x128xf32, #tpu.memory_space<vmem>>, vector<8x128xf32>,
    return
  }
  func.func @transform_0(%arg0: i32, %arg1: i32) -> (i32, i32, i32) {
    %c0_i32 = arith.constant 0 : i32
    %c0_i32_0 = arith.constant 0 : i32
    return %arg1, %c0_i32, %arg0 : i32, i32, i32
  }
  func.func @transform_1(%arg0: i32, %arg1: i32) -> (i32, i32) {
    %c0_i32 = arith.constant 0 : i32
    %c0_i32_0 = arith.constant 0 : i32
    return %c0_i32, %arg0 : i32, i32
  }
  func.func @transform_2(%arg0: i32, %arg1: i32) -> (i32, i32) {
    %c0_i32 = arith.constant 0 : i32
    return %arg1, %arg0 : i32, i32
  }
}

</mosaic_0001>

<llo_original>
// kernel: tpu_custom_call.1
$region0: #{tpu_custom_call.1}
  #allocation0 [shape = 'u32[]', space=smem, size = 0x4, offset = 0x4, fixed_abs, tag = 'smem constant byte address 0x4 - core index']
  #allocation1 [shape = 'u32[144,128]{1,0:T(1,128)}', space=vmem, size = 0x12000, scoped, tag = 'internal scratch']
  %s0 = inlined_call_operand.hbm [shape: f32[8,8,128], index: 0, kind: input, shape index: {}]
  %s1 = inlined_call_operand.hbm [shape: f32[8,128], index: 1, kind: input, shape index: {}]
  %s2 = inlined_call_operand.hbm [shape: f32[8,128], index: 2, kind: output, shape index: {}]
  %s3 = sld [smem:[#allocation0]]
  $region26: #{tpu_custom_call.1} parent=0
    _
  %s5 = ssub.s32 1, %s3
  %s6 = scalar_select 0, %s5, %s3
  $region1: #{tpu_custom_call.1} parent=0
    #allocation2 [shape = 'u8[32768]{0}', space=vmem, size = 0x8000, scoped, tag = 'input window, operand 0, single buffered']
    #allocation3 [shape = 's32[1]{0}', space=sflag, size = 0x4, scoped, tag = 'scoped memory for tpu_custom_call.1']
    #allocation4 [shape = 's32[1]{0}', space=sflag, size = 0x4, scoped, tag = 'scoped memory for tpu_custom_call.1']
    #allocation5 [shape = 'u8[4096]{0}', space=vmem, size = 0x1000, scoped, tag = 'input window, operand 1, single buffered']
    #allocation6 [shape = 's32[1]{0}', space=sflag, size = 0x4, scoped, tag = 'scoped memory for tpu_custom_call.1']
    #allocation7 [shape = 'u8[4096]{0}', space=vmem, size = 0x1000, scoped, tag = 'output window, operand 0, single buffered']
    %7 = vsyncpa [#allocation3], 0
    %8 = vsyncpa [#allocation6], 0
    %9 = vsyncpa [#allocation4], 0
    // Predicated region
    $region2: #{tpu_custom_call.1} parent=1 // pred_check
      _
    $region3: #{tpu_custom_call.1} parent=1 // pred_check_branch
      %11 = sbr.rel (0) target = $region5
    $region4: #{tpu_custom_call.1} parent=1 // pred_region
      %s13 = ssub.s32 1024, 1024
      %14 = vsyncadd [#allocation3], %s13
      %s15 = sshll.u32 [#allocation2], 4
      %s16 = int_to_ptr.vmem [resolvable:$true] %s15
      %21 = dma.hbm_to_vmem [thread:$0]  %s0, 1024, %s16, [#allocation3], 128, 128, 8
    $region5: #{tpu_custom_call.1} parent=1 // pred_fallthru
      _
    // Predicated region
    $region6: #{tpu_custom_call.1} parent=1 // pred_check
      _
    $region7: #{tpu_custom_call.1} parent=1 // pred_check_branch
      %23 = sbr.rel (0) target = $region9
    $region8: #{tpu_custom_call.1} parent=1 // pred_region
      %s25 = ssub.s32 128, 128
      %26 = vsyncadd [#allocation6], %s25
      %s28 = sshll.u32 [#allocation5], 4
      %s29 = int_to_ptr.vmem [resolvable:$true] %s28
      %31 = dma.hbm_to_vmem [thread:$0]  %s1, 128, %s29, [#allocation6]
    $region9: #{tpu_custom_call.1} parent=1 // pred_fallthru
      _
    // Predicated region
    $region10: #{tpu_custom_call.1} parent=1 // pred_check
      _
    $region11: #{tpu_custom_call.1} parent=1 // pred_check_branch
      %33 = sbr.rel (0) target = $region13
    $region12: #{tpu_custom_call.1} parent=1 // pred_region
      %34 = dma.done [#allocation3], 1024
    $region13: #{tpu_custom_call.1} parent=1 // pred_fallthru
      _
    // Predicated region
    $region14: #{tpu_custom_call.1} parent=1 // pred_check
      _
    $region15: #{tpu_custom_call.1} parent=1 // pred_check_branch
      %36 = sbr.rel (0) target = $region17
    $region16: #{tpu_custom_call.1} parent=1 // pred_region
      %37 = dma.done [#allocation6], 128
    $region17: #{tpu_custom_call.1} parent=1 // pred_fallthru
      _
    %v38 = vld [vmem:[#allocation2] sm:$0xff]
    %v39 = vld [vmem:[#allocation2 + $0x8] sm:$0xff]
    %v40 = vld [vmem:[#allocation2 + $0x10] sm:$0xff]
    %v41 = vld [vmem:[#allocation2 + $0x18] sm:$0xff]
    %v42 = vld [vmem:[#allocation2 + $0x20] sm:$0xff]
    %v43 = vld [vmem:[#allocation2 + $0x28] sm:$0xff]
    %v44 = vld [vmem:[#allocation2 + $0x30] sm:$0xff]
    %v45 = vld [vmem:[#allocation2 + $0x38] sm:$0xff]
    %v46 = vld [vmem:[#allocation5] sm:$0xff]
    %v47 = vmul.f32 %v38, %v46
    %v48 = vmul.f32 %v39, %v46
    %v49 = vmul.f32 %v40, %v46
    %v50 = vmul.f32 %v41, %v46
    %v51 = vmul.f32 %v42, %v46
    %v52 = vmul.f32 %v43, %v46
    %v53 = vmul.f32 %v44, %v46
    %v54 = vmul.f32 %v45, %v46
    %v55 = vrot.slane %v47, 4
    %v56 = vadd.f32 %v47, %v55
    %v57 = vrot.slane %v56, 2
    %v58 = vadd.f32 %v56, %v57
    %v59 = vrot.slane %v58, 1
    %v60 = vadd.f32 %v58, %v59
    %v61 = vrot.slane %v48, 4
    %v62 = vadd.f32 %v48, %v61
    %v63 = vrot.slane %v62, 2
    %v64 = vadd.f32 %v62, %v63
    %v65 = vrot.slane %v64, 1
    %v66 = vadd.f32 %v64, %v65
    %v67 = vrot.slane %v49, 4
    %v68 = vadd.f32 %v49, %v67
    %v69 = vrot.slane %v68, 2
    %v70 = vadd.f32 %v68, %v69
    %v71 = vrot.slane %v70, 1
    %v72 = vadd.f32 %v70, %v71
    %v73 = vrot.slane %v50, 4
    %v74 = vadd.f32 %v50, %v73
    %v75 = vrot.slane %v74, 2
    %v76 = vadd.f32 %v74, %v75
    %v77 = vrot.slane %v76, 1
    %v78 = vadd.f32 %v76, %v77
    %v79 = vrot.slane %v51, 4
    %v80 = vadd.f32 %v51, %v79
    %v81 = vrot.slane %v80, 2
    %v82 = vadd.f32 %v80, %v81
    %v83 = vrot.slane %v82, 1
    %v84 = vadd.f32 %v82, %v83
    %v85 = vrot.slane %v52, 4
    %v86 = vadd.f32 %v52, %v85
    %v87 = vrot.slane %v86, 2
    %v88 = vadd.f32 %v86, %v87
    %v89 = vrot.slane %v88, 1
    %v90 = vadd.f32 %v88, %v89
    %v91 = vrot.slane %v53, 4
    %v92 = vadd.f32 %v53, %v91
    %v93 = vrot.slane %v92, 2
    %v94 = vadd.f32 %v92, %v93
    %v95 = vrot.slane %v94, 1
    %v96 = vadd.f32 %v94, %v95
    %v97 = vrot.slane %v54, 4
    %v98 = vadd.f32 %v54, %v97
    %v99 = vrot.slane %v98, 2
    %v100 = vadd.f32 %v98, %v99
    %v101 = vrot.slane %v100, 1
    %v102 = vadd.f32 %v100, %v101
    %vm111 = vcmask 1041409
    %v112 = vsel %vm111, %v66, %v60
    %vm113 = vcmask 1042434
    %v114 = vsel %vm113, %v72, %v112
    %vm115 = vcmask 1043459
    %v116 = vsel %vm115, %v78, %v114
    %vm117 = vcmask 1044484
    %v118 = vsel %vm117, %v84, %v116
    %vm119 = vcmask 1045509
    %v120 = vsel %vm119, %v90, %v118
    %vm121 = vcmask 1046534
    %v122 = vsel %vm121, %v96, %v120
    %vm123 = vcmask 1047559
    %v124 = vsel %vm123, %v102, %v122
    %126 = vst [vmem:[#allocation7] sm:$0xff] %v124
    // Predicated region
    $region18: #{tpu_custom_call.1} parent=1 // pred_check
      _
    $region19: #{tpu_custom_call.1} parent=1 // pred_check_branch
      %128 = sbr.rel (0) target = $region21
    $region20: #{tpu_custom_call.1} parent=1 // pred_region
      %s130 = ssub.s32 128, 128
      %131 = vsyncadd [#allocation4], %s130
      %s133 = sshll.u32 [#allocation7], 4
      %s134 = int_to_ptr.vmem [resolvable:$true] %s133
      %136 = dma.vmem_to_hbm [thread:$0]  %s134, 128, %s2, [#allocation4]
    $region21: #{tpu_custom_call.1} parent=1 // pred_fallthru
      _
    // Predicated region
    $region22: #{tpu_custom_call.1} parent=1 // pred_check
      _
    $region23: #{tpu_custom_call.1} parent=1 // pred_check_branch
      %138 = sbr.rel (0) target = $region25
    $region24: #{tpu_custom_call.1} parent=1 // pred_region
      %139 = dma.done [#allocation4], 128
    $region25: #{tpu_custom_call.1} parent=1 // pred_fallthru
      _
    %140 = vsyncpa [#allocation3], 1
    %141 = vsyncpa [#allocation6], 1
    %142 = vsyncpa [#allocation4], 1

</llo_original>
